<compile_context>
chip_gen: v5e
topology: v5e:2x2
jax: 0.10.0
libtpu: 0.0.40
codegen_flags: <defaults>
</compile_context>

<pallas_src>
import functools

import jax
import jax.numpy as jnp
from jax.experimental import pallas as pl
from jax.experimental.pallas import tpu as pltpu


# ----------------------------------------------------------------------------- kernel
def hybrid_recsys_kernel(
    uid_ref, mid_ref,            # (1, TILE_B) int32   — batch on the lane axis
    ut_ref, mt_ref,              # (2E, n_u_pad), (2E, n_m_pad) combined transposed tables
    w1u_ref, w1m_ref, b1_ref,    # (H1, E), (H1, E), (H1, 1)
    w2_ref, b2_ref,              # (H2, H1), (H2, 1)   (BN1 folded in)
    w3_ref, b3_ref,              # (H3, H2), (H3, 1)   (BN2 folded in)
    whead_ref, bout_ref,         # (1, E+H3), (1, 1)   (BN3 + MF scalar folded in)
    out_ref,                     # (1, TILE_B) f32     — lane-dense output block
):
    f32 = jnp.float32
    two_e, n_u = ut_ref.shape
    _, n_m = mt_ref.shape
    e = two_e // 2
    tile_b = uid_ref.shape[1]

    uid = uid_ref[...]           # (1, TILE_B)
    mid = mid_ref[...]

    # ---- fused embedding gather: table_T @ one-hot on the MXU (exact for 0/1 weights) ----
    # One dot per id type gathers both the MF and MLP rows ((2E, TILE_B)).
    # TODO(synk): switch to a DMA row-gather once the catalog no longer fits VMEM.
    iota_u = jax.lax.broadcasted_iota(jnp.int32, (n_u, tile_b), 0)
    iota_m = jax.lax.broadcasted_iota(jnp.int32, (n_m, tile_b), 0)
    oh_u = jnp.where(iota_u == uid, 1.0, 0.0).astype(f32)    # (n_u, TILE_B)
    oh_m = jnp.where(iota_m == mid, 1.0, 0.0).astype(f32)    # (n_m, TILE_B)

    u_all = jnp.dot(ut_ref[...], oh_u, preferred_element_type=f32)   # (2E, TILE_B)
    m_all = jnp.dot(mt_ref[...], oh_m, preferred_element_type=f32)
    u_mf, u_mlp = u_all[:e, :], u_all[e:, :]      # sublane-aligned slices (E = 32)
    m_mf, m_mlp = m_all[:e, :], m_all[e:, :]

    # ---- MLP branch (batch on lanes), BN affines pre-folded into the following weights ----
    h = (jnp.dot(w1u_ref[...], u_mlp, preferred_element_type=f32)
         + jnp.dot(w1m_ref[...], m_mlp, preferred_element_type=f32)
         + b1_ref[...])
    h = jnp.maximum(h, 0.0)
    h = jnp.maximum(jnp.dot(w2_ref[...], h, preferred_element_type=f32) + b2_ref[...], 0.0)
    h = jnp.maximum(jnp.dot(w3_ref[...], h, preferred_element_type=f32) + b3_ref[...], 0.0)

    # ---- head: sublane-stack the MF product (E rows) with h (H3 rows) -> ONE small dot ----
    feat = jnp.concatenate([u_mf * m_mf, h], axis=0)          # (E+H3, TILE_B)
    out_ref[...] = (jnp.dot(whead_ref[...], feat, preferred_element_type=f32)
                    + bout_ref[...])


# ----------------------------------------------------------------------------- params
def init_params(key, n_users, n_movies, embedding_size=32, hidden_size=(64, 32, 16)):
    """Deterministic synthetic parameters in PyTorch-equivalent (unfolded) form."""
    n_keys = 4 + 6 * len(hidden_size) + 2
    ks = iter(jax.random.split(key, n_keys))
    nk = lambda: next(ks)

    p = {}
    p["user_emb_mf"] = jax.random.normal(nk(), (n_users, embedding_size), jnp.float32) * 0.1
    p["movie_emb_mf"] = jax.random.normal(nk(), (n_movies, embedding_size), jnp.float32) * 0.1
    p["user_emb_mlp"] = jax.random.normal(nk(), (n_users, embedding_size), jnp.float32) * 0.1
    p["movie_emb_mlp"] = jax.random.normal(nk(), (n_movies, embedding_size), jnp.float32) * 0.1

    in_size = embedding_size * 2
    for i, hidden in enumerate(hidden_size, start=1):
        # torch Linear weight is (out, in); stored transposed here for x @ W.
        p[f"w{i}"] = jax.random.normal(nk(), (in_size, hidden), jnp.float32) * 0.1
        p[f"b{i}"] = jax.random.normal(nk(), (1, hidden), jnp.float32) * 0.05
        # BatchNorm1d running stats / affine (eval mode).
        p[f"gamma{i}"] = 1.0 + 0.1 * jax.random.normal(nk(), (1, hidden), jnp.float32)
        p[f"beta{i}"] = 0.05 * jax.random.normal(nk(), (1, hidden), jnp.float32)
        p[f"mean{i}"] = 0.1 * jax.random.normal(nk(), (1, hidden), jnp.float32)
        p[f"var{i}"] = 0.5 + jnp.abs(jax.random.normal(nk(), (1, hidden), jnp.float32))
        in_size = hidden

    # Output layer Linear(hidden[-1] + 1, 1); row 0 multiplies mf_output.
    p["w_out"] = jax.random.normal(nk(), (hidden_size[-1] + 1, 1), jnp.float32) * 0.1
    p["b_out"] = jax.random.normal(nk(), (1, 1), jnp.float32) * 0.05
    return p


def fold_params(p, embedding_size, hidden_size, eps=1e-5):
    """Produce kernel-layout params: transposed (feature-major), BN folded, heads merged."""
    E = embedding_size
    L = len(hidden_size)

    def pad_cat(t_T, multiple=128):
        # t_T: (2E, n_cat); pad the categorical (lane) dim to a multiple of 128.
        pad = (-t_T.shape[1]) % multiple
        if pad:
            t_T = jnp.pad(t_T, ((0, 0), (0, pad)))
        return t_T

    kp = {}
    # Combined per-entity tables, transposed: rows 0:E = MF, rows E:2E = MLP; lanes = category.
    kp["user_tab"] = pad_cat(jnp.concatenate([p["user_emb_mf"], p["user_emb_mlp"]], axis=1).T)
    kp["movie_tab"] = pad_cat(jnp.concatenate([p["movie_emb_mf"], p["movie_emb_mlp"]], axis=1).T)

    scales, shifts = [], []
    for i in range(1, L + 1):
        s = p[f"gamma{i}"] / jnp.sqrt(p[f"var{i}"] + eps)      # (1, H_i)
        t = p[f"beta{i}"] - p[f"mean{i}"] * s
        scales.append(s)
        shifts.append(t)

    # Layer 1 (no preceding BN): split the concat weight, transpose for W @ x_T.
    kp["w1_u"] = p["w1"][:E, :].T                              # (H1, E)
    kp["w1_m"] = p["w1"][E:, :].T                              # (H1, E)
    kp["b1"] = p["b1"].T                                       # (H1, 1)

    # Layers 2..L: fold previous layer's BN affine into this layer's linear (ReLU precedes BN).
    for i in range(2, L + 1):
        s_prev, t_prev = scales[i - 2], shifts[i - 2]
        w_folded = p[f"w{i}"] * s_prev.T                       # diag(s) @ W, (H_{i-1}, H_i)
        kp[f"w{i}"] = w_folded.T                               # (H_i, H_{i-1})
        kp[f"b{i}"] = (t_prev @ p[f"w{i}"] + p[f"b{i}"]).T     # (H_i, 1)

    # Head: fold last BN; MF scalar weight becomes a constant (1, E) row so the MF
    # reduction is absorbed into a single stacked head dot.
    s_last, t_last = scales[-1], shifts[-1]
    w_out = p["w_out"]                                         # (H_last + 1, 1)
    w_mlp = w_out[1:, :] * s_last.T                            # (H_last, 1)
    w_mf_row = jnp.full((1, E), w_out[0, 0], jnp.float32)      # (1, E)
    kp["w_head"] = jnp.concatenate([w_mf_row, w_mlp.T], axis=1)  # (1, E + H_last)
    kp["b_out"] = t_last @ w_out[1:, :] + p["b_out"]           # (1, 1)
    return kp


# ----------------------------------------------------------------------------- wrapper
@functools.partial(jax.jit, static_argnames=("tile_b",))
def hybrid_recsys_forward(kparams, user_ids, movie_ids, *, tile_b=2048):
    B = user_ids.shape[0]

    # Lane-axis batch tile: round to a multiple of 128 and clamp to the 128-padded batch.
    # (v6e: can raise to 4096-8192; v7x: keep <= ~4096 and prefer an even tile count so
    #  dimension_semantics=('parallel',) keeps both TensorCores busy.)
    tile_b = max(128, (int(tile_b) // 128) * 128)
    tile_b = min(tile_b, ((B + 127) // 128) * 128)
    num_tiles = pl.cdiv(B, tile_b)
    b_pad = num_tiles * tile_b

    # Lane-dense id slabs (num_tiles, 1, TILE_B); padded ids are 0 (valid row, result discarded).
    uid = jnp.pad(user_ids.astype(jnp.int32), (0, b_pad - B)).reshape(num_tiles, 1, tile_b)
    mid = jnp.pad(movie_ids.astype(jnp.int32), (0, b_pad - B)).reshape(num_tiles, 1, tile_b)

    const_args = (
        kparams["user_tab"], kparams["movie_tab"],
        kparams["w1_u"], kparams["w1_m"], kparams["b1"],
        kparams["w2"], kparams["b2"],
        kparams["w3"], kparams["b3"],
        kparams["w_head"], kparams["b_out"],
    )

    two_e, n_u_pad = kparams["user_tab"].shape
    _, n_m_pad = kparams["movie_tab"].shape
    e = two_e // 2
    h1 = kparams["w1_u"].shape[0]
    h2 = kparams["w2"].shape[0]
    h3 = kparams["w3"].shape[0]
    # The in-kernel one-hot gather is only sensible for small, VMEM-resident catalogs.
    assert n_u_pad <= 4096 and n_m_pad <= 4096, (
        "catalog too large for the one-hot gather; see TODO(synk): DMA row-gather")

    id_spec = pl.BlockSpec((None, 1, tile_b), lambda i: (i, 0, 0))   # leading grid dim squeezed
    const_map = lambda i: (0, 0)

    def const_spec(a):
        # Constants: block index never changes -> single-buffer to halve their VMEM residency.
        try:
            return pl.BlockSpec(a.shape, const_map, pipeline_mode=pl.Buffered(1))
        except Exception:  # older jax without pipeline_mode kwarg
            return pl.BlockSpec(a.shape, const_map)

    in_specs = [id_spec, id_spec] + [const_spec(a) for a in const_args]
    out_spec = pl.BlockSpec((None, 1, tile_b), lambda i: (i, 0, 0))

    flops = 2 * b_pad * (two_e * (n_u_pad + n_m_pad)          # gather dots
                         + 2 * e * h1 + h1 * h2 + h2 * h3     # MLP
                         + (e + h3))                          # merged head dot
    param_bytes = sum(int(a.size) * a.dtype.itemsize for a in const_args)
    bytes_accessed = 2 * b_pad * 4 + b_pad * 4 + param_bytes  # ids + output + params
    cost = pl.CostEstimate(flops=int(flops), transcendentals=0,
                           bytes_accessed=int(bytes_accessed))

    out = pl.pallas_call(
        hybrid_recsys_kernel,
        out_shape=jax.ShapeDtypeStruct((num_tiles, 1, tile_b), jnp.float32),
        grid_spec=pltpu.PrefetchScalarGridSpec(
            num_scalar_prefetch=0,
            grid=(num_tiles,),
            in_specs=in_specs,
            out_specs=out_spec,
        ),
        compiler_params=pltpu.CompilerParams(
            dimension_semantics=("parallel",),        # shards tiles across v7x's 2 TCs
            vmem_limit_bytes=32 * 1024 * 1024,        # >= default on all of v5e/v6e/v7x
        ),
        cost_estimate=cost,
    )(uid, mid, *const_args)

    return out.reshape(b_pad)[:B]                     # .squeeze(1) -> (B,)


# ----------------------------------------------------------------------------- reference
def _reference_forward(params, user_ids, movie_ids):
    """Pure-JAX reference with the ORIGINAL (unfolded) PyTorch semantics (eval-mode BN).

    Module order per layer is Linear -> ReLU -> BatchNorm1d, matching HybridRecSys.
    """
    u_mf = params["user_emb_mf"][user_ids]
    m_mf = params["movie_emb_mf"][movie_ids]
    mf = jnp.sum(u_mf * m_mf, axis=1, keepdims=True)

    x = jnp.concatenate(
        [params["user_emb_mlp"][user_ids], params["movie_emb_mlp"][movie_ids]], axis=1)
    n_layers = len([k for k in params if k.startswith("gamma")])
    for i in range(1, n_layers + 1):
        x = jnp.maximum(x @ params[f"w{i}"] + params[f"b{i}"], 0.0)
        scale = params[f"gamma{i}"] / jnp.sqrt(params[f"var{i}"] + 1e-5)
        x = (x - params[f"mean{i}"]) * scale + params[f"beta{i}"]

    feat = jnp.concatenate([mf, x], axis=1)
    out = feat @ params["w_out"] + params["b_out"]
    return out[:, 0]


# ----------------------------------------------------------------------------- main
if __name__ == "__main__":
    key = jax.random.PRNGKey(0)
    n_users, n_movies = 10, 15
    batch = 8
    embedding_size = 32
    hidden_size = (64, 32, 16)

    k_param, k_u, k_m = jax.random.split(key, 3)
    params = init_params(k_param, n_users, n_movies, embedding_size, hidden_size)
    kparams = fold_params(params, embedding_size, hidden_size)

    user_ids = jax.random.randint(k_u, (batch,), 0, n_users, dtype=jnp.int32)
    movie_ids = jax.random.randint(k_m, (batch,), 0, n_movies, dtype=jnp.int32)

    out = hybrid_recsys_forward(kparams, user_ids, movie_ids)
    out = jax.block_until_ready(out)

    ref = _reference_forward(params, user_ids, movie_ids)
    assert out.shape == (batch,)
    # Tolerance allows for the MXU's default reduced-precision f32 matmul passes.
    assert jnp.allclose(out, ref, atol=5e-3, rtol=5e-3), (out, ref)

    print("KERNEL_OK")
</pallas_src>

<mosaic_0001>
module attributes {stable_mosaic.version = 11 : i64} {
  func.func @hybrid_recsys_kernel(%arg0: i32, %arg1: memref<1x1x128xi32, #tpu.memory_space<vmem>>, %arg2: memref<1x1x128xi32, #tpu.memory_space<vmem>>, %arg3: memref<64x128xf32, #tpu.memory_space<vmem>>, %arg4: memref<64x128xf32, #tpu.memory_space<vmem>>, %arg5: memref<64x32xf32, #tpu.memory_space<vmem>>, %arg6: memref<64x32xf32, #tpu.memory_space<vmem>>, %arg7: memref<64x1xf32, #tpu.memory_space<vmem>>, %arg8: memref<32x64xf32, #tpu.memory_space<vmem>>, %arg9: memref<32x1xf32, #tpu.memory_space<vmem>>, %arg10: memref<16x32xf32, #tpu.memory_space<vmem>>, %arg11: memref<16x1xf32, #tpu.memory_space<vmem>>, %arg12: memref<1x48xf32, #tpu.memory_space<vmem>>, %arg13: memref<1x1xf32, #tpu.memory_space<vmem>>, %arg14: memref<1x1x128xf32, #tpu.memory_space<vmem>>) attributes {dimension_semantics = [#tpu.dimension_semantics<parallel>], iteration_bounds = array<i64: 1>, scalar_prefetch = 0 : i64, scratch_operands = 0 : i64, tpu.core_type = #tpu.core_type<tc>, window_params = [{transform_indices = @transform_0, window_bounds = array<i64: 1, 1, 128>}, {transform_indices = @transform_1, window_bounds = array<i64: 1, 1, 128>}, {pipeline_mode = #tpu.pipeline_mode<synchronous>, transform_indices = @transform_2, window_bounds = array<i64: 64, 128>}, {pipeline_mode = #tpu.pipeline_mode<synchronous>, transform_indices = @transform_3, window_bounds = array<i64: 64, 128>}, {pipeline_mode = #tpu.pipeline_mode<synchronous>, transform_indices = @transform_4, window_bounds = array<i64: 64, 32>}, {pipeline_mode = #tpu.pipeline_mode<synchronous>, transform_indices = @transform_5, window_bounds = array<i64: 64, 32>}, {pipeline_mode = #tpu.pipeline_mode<synchronous>, transform_indices = @transform_6, window_bounds = array<i64: 64, 1>}, {pipeline_mode = #tpu.pipeline_mode<synchronous>, transform_indices = @transform_7, window_bounds = array<i64: 32, 64>}, {pipeline_mode = #tpu.pipeline_mode<synchronous>, transform_indices = @transform_8, window_bounds = array<i64: 32, 1>}, {pipeline_mode = #tpu.pipeline_mode<synchronous>, transform_indices = @transform_9, window_bounds = array<i64: 16, 32>}, {pipeline_mode = #tpu.pipeline_mode<synchronous>, transform_indices = @transform_10, window_bounds = array<i64: 16, 1>}, {pipeline_mode = #tpu.pipeline_mode<synchronous>, transform_indices = @transform_11, window_bounds = array<i64: 1, 48>}, {pipeline_mode = #tpu.pipeline_mode<synchronous>, transform_indices = @transform_12, window_bounds = array<i64: 1, 1>}, {transform_indices = @transform_13, window_bounds = array<i64: 1, 1, 128>}]} {
    %c0 = arith.constant 0 : index
    %c0_0 = arith.constant 0 : index
    %c0_1 = arith.constant 0 : index
    %0 = vector.load %arg1[%c0, %c0_0, %c0_1] : memref<1x1x128xi32, #tpu.memory_space<vmem>>, vector<1x1x128xi32>
    %1 = vector.shape_cast %0 : vector<1x1x128xi32> to vector<1x128xi32>
    %c0_2 = arith.constant 0 : index
    %c0_3 = arith.constant 0 : index
    %c0_4 = arith.constant 0 : index
    %2 = vector.load %arg2[%c0_2, %c0_3, %c0_4] : memref<1x1x128xi32, #tpu.memory_space<vmem>>, vector<1x1x128xi32>
    %3 = vector.shape_cast %2 : vector<1x1x128xi32> to vector<1x128xi32>
    %4 = tpu.iota {dimensions = array<i32: 0>} : vector<128x128xi32>
    %5 = tpu.iota {dimensions = array<i32: 0>} : vector<128x128xi32>
    %6 = vector.broadcast %1 : vector<1x128xi32> to vector<128x128xi32>
    %7 = arith.cmpi eq, %4, %6 : vector<128x128xi32>
    %cst = arith.constant 1.000000e+00 : f32
    %cst_5 = arith.constant 0.000000e+00 : f32
    %8 = vector.broadcast %cst : f32 to vector<128x128xf32>
    %9 = vector.broadcast %cst_5 : f32 to vector<128x128xf32>
    %10 = arith.select %7, %8, %9 : vector<128x128xi1>, vector<128x128xf32>
    %11 = vector.broadcast %3 : vector<1x128xi32> to vector<128x128xi32>
    %12 = arith.cmpi eq, %5, %11 : vector<128x128xi32>
    %cst_6 = arith.constant 1.000000e+00 : f32
    %cst_7 = arith.constant 0.000000e+00 : f32
    %13 = vector.broadcast %cst_6 : f32 to vector<128x128xf32>
    %14 = vector.broadcast %cst_7 : f32 to vector<128x128xf32>
    %15 = arith.select %12, %13, %14 : vector<128x128xi1>, vector<128x128xf32>
    %c0_8 = arith.constant 0 : index
    %c0_9 = arith.constant 0 : index
    %16 = vector.load %arg3[%c0_8, %c0_9] : memref<64x128xf32, #tpu.memory_space<vmem>>, vector<64x128xf32>
    %cst_10 = arith.constant dense<0.000000e+00> : vector<64x128xf32>
    %17 = tpu.matmul %16, %10, %cst_10 {dimension_numbers = #tpu.dot_dimension_numbers<[1], [0], [0], [1], [0, 0, 1, 1], [], []>} : vector<64x128xf32>, vector<128x128xf32>, vector<64x128xf32> -> vector<64x128xf32>
    %c0_11 = arith.constant 0 : index
    %c0_12 = arith.constant 0 : index
    %18 = vector.load %arg4[%c0_11, %c0_12] : memref<64x128xf32, #tpu.memory_space<vmem>>, vector<64x128xf32>
    %cst_13 = arith.constant dense<0.000000e+00> : vector<64x128xf32>
    %19 = tpu.matmul %18, %15, %cst_13 {dimension_numbers = #tpu.dot_dimension_numbers<[1], [0], [0], [1], [0, 0, 1, 1], [], []>} : vector<64x128xf32>, vector<128x128xf32>, vector<64x128xf32> -> vector<64x128xf32>
    %20 = vector.extract_strided_slice %17 {offsets = [0, 0], sizes = [32, 128], strides = [1, 1]} : vector<64x128xf32> to vector<32x128xf32>
    %21 = vector.extract_strided_slice %17 {offsets = [32, 0], sizes = [32, 128], strides = [1, 1]} : vector<64x128xf32> to vector<32x128xf32>
    %22 = vector.extract_strided_slice %19 {offsets = [0, 0], sizes = [32, 128], strides = [1, 1]} : vector<64x128xf32> to vector<32x128xf32>
    %23 = vector.extract_strided_slice %19 {offsets = [32, 0], sizes = [32, 128], strides = [1, 1]} : vector<64x128xf32> to vector<32x128xf32>
    %c0_14 = arith.constant 0 : index
    %c0_15 = arith.constant 0 : index
    %24 = vector.load %arg5[%c0_14, %c0_15] : memref<64x32xf32, #tpu.memory_space<vmem>>, vector<64x32xf32>
    %cst_16 = arith.constant dense<0.000000e+00> : vector<64x128xf32>
    %25 = tpu.matmul %24, %21, %cst_16 {dimension_numbers = #tpu.dot_dimension_numbers<[1], [0], [0], [1], [0, 0, 1, 1], [], []>} : vector<64x32xf32>, vector<32x128xf32>, vector<64x128xf32> -> vector<64x128xf32>
    %c0_17 = arith.constant 0 : index
    %c0_18 = arith.constant 0 : index
    %26 = vector.load %arg6[%c0_17, %c0_18] : memref<64x32xf32, #tpu.memory_space<vmem>>, vector<64x32xf32>
    %cst_19 = arith.constant dense<0.000000e+00> : vector<64x128xf32>
    %27 = tpu.matmul %26, %23, %cst_19 {dimension_numbers = #tpu.dot_dimension_numbers<[1], [0], [0], [1], [0, 0, 1, 1], [], []>} : vector<64x32xf32>, vector<32x128xf32>, vector<64x128xf32> -> vector<64x128xf32>
    %28 = arith.addf %25, %27 : vector<64x128xf32>
    %c0_20 = arith.constant 0 : index
    %c0_21 = arith.constant 0 : index
    %29 = vector.load %arg7[%c0_20, %c0_21] : memref<64x1xf32, #tpu.memory_space<vmem>>, vector<64x1xf32>
    %30 = vector.broadcast %29 : vector<64x1xf32> to vector<64x128xf32>
    %31 = arith.addf %28, %30 : vector<64x128xf32>
    %cst_22 = arith.constant 0.000000e+00 : f32
    %32 = vector.broadcast %cst_22 : f32 to vector<64x128xf32>
    %33 = arith.maximumf %31, %32 : vector<64x128xf32>
    %c0_23 = arith.constant 0 : index
    %c0_24 = arith.constant 0 : index
    %34 = vector.load %arg8[%c0_23, %c0_24] : memref<32x64xf32, #tpu.memory_space<vmem>>, vector<32x64xf32>
    %cst_25 = arith.constant dense<0.000000e+00> : vector<32x128xf32>
    %35 = tpu.matmul %34, %33, %cst_25 {dimension_numbers = #tpu.dot_dimension_numbers<[1], [0], [0], [1], [0, 0, 1, 1], [], []>} : vector<32x64xf32>, vector<64x128xf32>, vector<32x128xf32> -> vector<32x128xf32>
    %c0_26 = arith.constant 0 : index
    %c0_27 = arith.constant 0 : index
    %36 = vector.load %arg9[%c0_26, %c0_27] : memref<32x1xf32, #tpu.memory_space<vmem>>, vector<32x1xf32>
    %37 = vector.broadcast %36 : vector<32x1xf32> to vector<32x128xf32>
    %38 = arith.addf %35, %37 : vector<32x128xf32>
    %cst_28 = arith.constant 0.000000e+00 : f32
    %39 = vector.broadcast %cst_28 : f32 to vector<32x128xf32>
    %40 = arith.maximumf %38, %39 : vector<32x128xf32>
    %c0_29 = arith.constant 0 : index
    %c0_30 = arith.constant 0 : index
    %41 = vector.load %arg10[%c0_29, %c0_30] : memref<16x32xf32, #tpu.memory_space<vmem>>, vector<16x32xf32>
    %cst_31 = arith.constant dense<0.000000e+00> : vector<16x128xf32>
    %42 = tpu.matmul %41, %40, %cst_31 {dimension_numbers = #tpu.dot_dimension_numbers<[1], [0], [0], [1], [0, 0, 1, 1], [], []>} : vector<16x32xf32>, vector<32x128xf32>, vector<16x128xf32> -> vector<16x128xf32>
    %c0_32 = arith.constant 0 : index
    %c0_33 = arith.constant 0 : index
    %43 = vector.load %arg11[%c0_32, %c0_33] : memref<16x1xf32, #tpu.memory_space<vmem>>, vector<16x1xf32>
    %44 = vector.broadcast %43 : vector<16x1xf32> to vector<16x128xf32>
    %45 = arith.addf %42, %44 : vector<16x128xf32>
    %cst_34 = arith.constant 0.000000e+00 : f32
    %46 = vector.broadcast %cst_34 : f32 to vector<16x128xf32>
    %47 = arith.maximumf %45, %46 : vector<16x128xf32>
    %48 = arith.mulf %20, %22 : vector<32x128xf32>
    %49 = tpu.concatenate %48, %47 in 0 : vector<32x128xf32>, vector<16x128xf32> -> vector<48x128xf32>
    %c0_35 = arith.constant 0 : index
    %c0_36 = arith.constant 0 : index
    %50 = vector.load %arg12[%c0_35, %c0_36] : memref<1x48xf32, #tpu.memory_space<vmem>>, vector<1x48xf32>
    %cst_37 = arith.constant dense<0.000000e+00> : vector<1x128xf32>
    %51 = tpu.matmul %50, %49, %cst_37 {dimension_numbers = #tpu.dot_dimension_numbers<[1], [0], [0], [1], [0, 0, 1, 1], [], []>} : vector<1x48xf32>, vector<48x128xf32>, vector<1x128xf32> -> vector<1x128xf32>
    %c0_38 = arith.constant 0 : index
    %c0_39 = arith.constant 0 : index
    %52 = vector.load %arg13[%c0_38, %c0_39] : memref<1x1xf32, #tpu.memory_space<vmem>>, vector<1x1xf32>
    %53 = vector.broadcast %52 : vector<1x1xf32> to vector<1x128xf32>
    %54 = arith.addf %51, %53 : vector<1x128xf32>
    %c0_40 = arith.constant 0 : index
    %c0_41 = arith.constant 0 : index
    %c0_42 = arith.constant 0 : index
    %55 = vector.load %arg14[%c0_40, %c0_41, %c0_42] : memref<1x1x128xf32, #tpu.memory_space<vmem>>, vector<1x1x128xf32>
    %56 = vector.shape_cast %55 : vector<1x1x128xf32> to vector<1x128xf32>
    %57 = vector.shape_cast %54 : vector<1x128xf32> to vector<1x1x128xf32>
    tpu.vector_store %arg14[%c0_40, %c0_41, %c0_42], %57 {strides = array<i32>} : memref<1x1x128xf32, #tpu.memory_space<vmem>>, vector<1x1x128xf32>,
    return
  }
  func.func @transform_0(%arg0: i32) -> (i32, i32, i32) {
    %c0_i32 = arith.constant 0 : i32
    %c0_i32_0 = arith.constant 0 : i32
    %c0_i32_1 = arith.constant 0 : i32
    return %arg0, %c0_i32, %c0_i32_0 : i32, i32, i32
  }
  func.func @transform_1(%arg0: i32) -> (i32, i32, i32) {
    %c0_i32 = arith.constant 0 : i32
    %c0_i32_0 = arith.constant 0 : i32
    %c0_i32_1 = arith.constant 0 : i32
    return %arg0, %c0_i32, %c0_i32_0 : i32, i32, i32
  }
  func.func @transform_2(%arg0: i32) -> (i32, i32) {
    %c0_i32 = arith.constant 0 : i32
    %c0_i32_0 = arith.constant 0 : i32
    %c0_i32_1 = arith.constant 0 : i32
    return %c0_i32, %c0_i32_0 : i32, i32
  }
  func.func @transform_3(%arg0: i32) -> (i32, i32) {
    %c0_i32 = arith.constant 0 : i32
    %c0_i32_0 = arith.constant 0 : i32
    %c0_i32_1 = arith.constant 0 : i32
    return %c0_i32, %c0_i32_0 : i32, i32
  }
  func.func @transform_4(%arg0: i32) -> (i32, i32) {
    %c0_i32 = arith.constant 0 : i32
    %c0_i32_0 = arith.constant 0 : i32
    %c0_i32_1 = arith.constant 0 : i32
    return %c0_i32, %c0_i32_0 : i32, i32
  }
  func.func @transform_5(%arg0: i32) -> (i32, i32) {
    %c0_i32 = arith.constant 0 : i32
    %c0_i32_0 = arith.constant 0 : i32
    %c0_i32_1 = arith.constant 0 : i32
    return %c0_i32, %c0_i32_0 : i32, i32
  }
  func.func @transform_6(%arg0: i32) -> (i32, i32) {
    %c0_i32 = arith.constant 0 : i32
    %c0_i32_0 = arith.constant 0 : i32
    %c0_i32_1 = arith.constant 0 : i32
    return %c0_i32, %c0_i32_0 : i32, i32
  }
  func.func @transform_7(%arg0: i32) -> (i32, i32) {
    %c0_i32 = arith.constant 0 : i32
    %c0_i32_0 = arith.constant 0 : i32
    %c0_i32_1 = arith.constant 0 : i32
    return %c0_i32, %c0_i32_0 : i32, i32
  }
  func.func @transform_8(%arg0: i32) -> (i32, i32) {
    %c0_i32 = arith.constant 0 : i32
    %c0_i32_0 = arith.constant 0 : i32
    %c0_i32_1 = arith.constant 0 : i32
    return %c0_i32, %c0_i32_0 : i32, i32
  }
  func.func @transform_9(%arg0: i32) -> (i32, i32) {
    %c0_i32 = arith.constant 0 : i32
    %c0_i32_0 = arith.constant 0 : i32
    %c0_i32_1 = arith.constant 0 : i32
    return %c0_i32, %c0_i32_0 : i32, i32
  }
  func.func @transform_10(%arg0: i32) -> (i32, i32) {
    %c0_i32 = arith.constant 0 : i32
    %c0_i32_0 = arith.constant 0 : i32
    %c0_i32_1 = arith.constant 0 : i32
    return %c0_i32, %c0_i32_0 : i32, i32
  }
  func.func @transform_11(%arg0: i32) -> (i32, i32) {
    %c0_i32 = arith.constant 0 : i32
    %c0_i32_0 = arith.constant 0 : i32
    %c0_i32_1 = arith.constant 0 : i32
    return %c0_i32, %c0_i32_0 : i32, i32
  }
  func.func @transform_12(%arg0: i32) -> (i32, i32) {
    %c0_i32 = arith.constant 0 : i32
    %c0_i32_0 = arith.constant 0 : i32
    %c0_i32_1 = arith.constant 0 : i32
    return %c0_i32, %c0_i32_0 : i32, i32
  }
  func.func @transform_13(%arg0: i32) -> (i32, i32, i32) {
    %c0_i32 = arith.constant 0 : i32
    %c0_i32_0 = arith.constant 0 : i32
    %c0_i32_1 = arith.constant 0 : i32
    return %arg0, %c0_i32, %c0_i32_0 : i32, i32, i32
  }
}

</mosaic_0001>

<llo_original>
// kernel: hybrid_recsys_forward.1
$region0: #{hybrid_recsys_forward.1}
  #allocation0 [shape = 'u32[]', space=smem, size = 0x4, offset = 0x4, fixed_abs, tag = 'smem constant byte address 0x4 - core index']
  #allocation1 [shape = 'u32[72,128]{1,0:T(1,128)}', space=vmem, size = 0x9000, scoped, tag = 'internal scratch']
  #allocation2 [shape = 'f32[1,1]{1,0:T(1,128)S(1)}', space=vmem, size = 0x200, scoped, tag = 'scoped memory for hybrid_recsys_forward.1']
  %s0 = inlined_call_operand.vmem [shape: s32[1,1,128], index: 0, kind: input, shape index: {}]
  %s1 = inlined_call_operand.vmem [shape: s32[1,1,128], index: 1, kind: input, shape index: {}]
  %s2 = inlined_call_operand.vmem [shape: f32[64,128], index: 2, kind: input, shape index: {}]
  %s3 = inlined_call_operand.vmem [shape: f32[64,128], index: 3, kind: input, shape index: {}]
  %s4 = inlined_call_operand.vmem [shape: f32[64,32], index: 4, kind: input, shape index: {}]
  %s5 = inlined_call_operand.vmem [shape: f32[64,32], index: 5, kind: input, shape index: {}]
  %s6 = inlined_call_operand.vmem [shape: f32[64,1], index: 6, kind: input, shape index: {}]
  %s7 = inlined_call_operand.vmem [shape: f32[32,64], index: 7, kind: input, shape index: {}]
  %s8 = inlined_call_operand.vmem [shape: f32[32,1], index: 8, kind: input, shape index: {}]
  %s9 = inlined_call_operand.vmem [shape: f32[16,32], index: 9, kind: input, shape index: {}]
  %s10 = inlined_call_operand.vmem [shape: f32[16,1], index: 10, kind: input, shape index: {}]
  %s11 = inlined_call_operand.vmem [shape: f32[1,48], index: 11, kind: input, shape index: {}]
  %s12 = inlined_call_operand.<no memory space> [shape: f32[1,1], index: 12, kind: input, shape index: {}]
  %s13 = inlined_call_operand.vmem [shape: f32[1,1,128], index: 13, kind: output, shape index: {}]
  %s14 = sld [smem:[#allocation0]]
  $region62: #{hybrid_recsys_forward.1} parent=0
    _
  %s16 = ssub.s32 1, %s14
  %s17 = scalar_select 0, %s16, %s14
  %v18 = vstv %s12
  %19 = vst [vmem:[#allocation2] sm:$0x1] %v18
  // Predicated region
  $region2: #{hybrid_recsys_forward.1} parent=0 // pred_check
    _
  $region3: #{hybrid_recsys_forward.1} parent=0 // pred_check_branch
    %21 = sbr.rel (0) target = $region5
  $region4: #{hybrid_recsys_forward.1} parent=0 // pred_region
    _
  $region5: #{hybrid_recsys_forward.1} parent=0 // pred_fallthru
    _
  // Predicated region
  $region6: #{hybrid_recsys_forward.1} parent=0 // pred_check
    _
  $region7: #{hybrid_recsys_forward.1} parent=0 // pred_check_branch
    %23 = sbr.rel (0) target = $region9
  $region8: #{hybrid_recsys_forward.1} parent=0 // pred_region
    _
  $region9: #{hybrid_recsys_forward.1} parent=0 // pred_fallthru
    _
  // Predicated region
  $region10: #{hybrid_recsys_forward.1} parent=0 // pred_check
    _
  $region11: #{hybrid_recsys_forward.1} parent=0 // pred_check_branch
    %25 = sbr.rel (0) target = $region13
  $region12: #{hybrid_recsys_forward.1} parent=0 // pred_region
    _
  $region13: #{hybrid_recsys_forward.1} parent=0 // pred_fallthru
    _
  // Predicated region
  $region14: #{hybrid_recsys_forward.1} parent=0 // pred_check
    _
  $region15: #{hybrid_recsys_forward.1} parent=0 // pred_check_branch
    %27 = sbr.rel (0) target = $region17
  $region16: #{hybrid_recsys_forward.1} parent=0 // pred_region
    _
  $region17: #{hybrid_recsys_forward.1} parent=0 // pred_fallthru
    _
  // Predicated region
  $region18: #{hybrid_recsys_forward.1} parent=0 // pred_check
    _
  $region19: #{hybrid_recsys_forward.1} parent=0 // pred_check_branch
    %29 = sbr.rel (0) target = $region21
  $region20: #{hybrid_recsys_forward.1} parent=0 // pred_region
    _
  $region21: #{hybrid_recsys_forward.1} parent=0 // pred_fallthru
    _
  // Predicated region
  $region22: #{hybrid_recsys_forward.1} parent=0 // pred_check
    _
  $region23: #{hybrid_recsys_forward.1} parent=0 // pred_check_branch
    %31 = sbr.rel (0) target = $region25
  $region24: #{hybrid_recsys_forward.1} parent=0 // pred_region
    _
  $region25: #{hybrid_recsys_forward.1} parent=0 // pred_fallthru
    _
  // Predicated region
  $region26: #{hybrid_recsys_forward.1} parent=0 // pred_check
    _
  $region27: #{hybrid_recsys_forward.1} parent=0 // pred_check_branch
    %33 = sbr.rel (0) target = $region29
  $region28: #{hybrid_recsys_forward.1} parent=0 // pred_region
    _
  $region29: #{hybrid_recsys_forward.1} parent=0 // pred_fallthru
    _
  // Predicated region
  $region30: #{hybrid_recsys_forward.1} parent=0 // pred_check
    _
  $region31: #{hybrid_recsys_forward.1} parent=0 // pred_check_branch
    %35 = sbr.rel (0) target = $region33
  $region32: #{hybrid_recsys_forward.1} parent=0 // pred_region
    _
  $region33: #{hybrid_recsys_forward.1} parent=0 // pred_fallthru
    _
  // Predicated region
  $region34: #{hybrid_recsys_forward.1} parent=0 // pred_check
    _
  $region35: #{hybrid_recsys_forward.1} parent=0 // pred_check_branch
    %37 = sbr.rel (0) target = $region37
  $region36: #{hybrid_recsys_forward.1} parent=0 // pred_region
    _
  $region37: #{hybrid_recsys_forward.1} parent=0 // pred_fallthru
    _
  // Predicated region
  $region38: #{hybrid_recsys_forward.1} parent=0 // pred_check
    _
  $region39: #{hybrid_recsys_forward.1} parent=0 // pred_check_branch
    %39 = sbr.rel (0) target = $region41
  $region40: #{hybrid_recsys_forward.1} parent=0 // pred_region
    _
  $region41: #{hybrid_recsys_forward.1} parent=0 // pred_fallthru
    _
  // Predicated region
  $region42: #{hybrid_recsys_forward.1} parent=0 // pred_check
    _
  $region43: #{hybrid_recsys_forward.1} parent=0 // pred_check_branch
    %41 = sbr.rel (0) target = $region45
  $region44: #{hybrid_recsys_forward.1} parent=0 // pred_region
    _
  $region45: #{hybrid_recsys_forward.1} parent=0 // pred_fallthru
    _
  // Predicated region
  $region46: #{hybrid_recsys_forward.1} parent=0 // pred_check
    _
  $region47: #{hybrid_recsys_forward.1} parent=0 // pred_check_branch
    %43 = sbr.rel (0) target = $region49
  $region48: #{hybrid_recsys_forward.1} parent=0 // pred_region
    _
  $region49: #{hybrid_recsys_forward.1} parent=0 // pred_fallthru
    _
  // Predicated region
  $region50: #{hybrid_recsys_forward.1} parent=0 // pred_check
    _
  $region51: #{hybrid_recsys_forward.1} parent=0 // pred_check_branch
    %45 = sbr.rel (0) target = $region53
  $region52: #{hybrid_recsys_forward.1} parent=0 // pred_region
    _
  $region53: #{hybrid_recsys_forward.1} parent=0 // pred_fallthru
    _
  %v46 = vld [vmem:[%s0] sm:$0x1]
  %v47 = vld [vmem:[%s1] sm:$0x1]
  %v48 = vlaneseq
  %v49 = vshrl.u32 %v48, 7
  %v50 = vadd.s32 %v49, 8
  %v51 = vadd.s32 %v49, 16
  %v52 = vadd.s32 %v49, 24
  %v53 = vadd.s32 %v49, 32
  %v54 = vadd.s32 %v49, 40
  %v55 = vadd.s32 %v49, 48
  %v56 = vadd.s32 %v49, 56
  %v57 = vadd.s32 %v49, 64
  %v58 = vadd.s32 %v49, 72
  %v59 = vadd.s32 %v49, 80
  %v60 = vadd.s32 %v49, 88
  %v61 = vadd.s32 %v49, 96
  %v62 = vadd.s32 %v49, 104
  %v63 = vadd.s32 %v49, 112
  %v64 = vadd.s32 %v49, 120
  %v65 = vperm.slane %v46, 0
  %vm66 = vcmp.eq.s32.totalorder %v49, %v65
  %vm67 = vcmp.eq.s32.totalorder %v50, %v65
  %vm68 = vcmp.eq.s32.totalorder %v51, %v65
  %vm69 = vcmp.eq.s32.totalorder %v52, %v65
  %vm70 = vcmp.eq.s32.totalorder %v53, %v65
  %vm71 = vcmp.eq.s32.totalorder %v54, %v65
  %vm72 = vcmp.eq.s32.totalorder %v55, %v65
  %vm73 = vcmp.eq.s32.totalorder %v56, %v65
  %vm74 = vcmp.eq.s32.totalorder %v57, %v65
  %vm75 = vcmp.eq.s32.totalorder %v58, %v65
  %vm76 = vcmp.eq.s32.totalorder %v59, %v65
  %vm77 = vcmp.eq.s32.totalorder %v60, %v65
  %vm78 = vcmp.eq.s32.totalorder %v61, %v65
  %vm79 = vcmp.eq.s32.totalorder %v62, %v65
  %vm80 = vcmp.eq.s32.totalorder %v63, %v65
  %vm81 = vcmp.eq.s32.totalorder %v64, %v65
  %v82 = vsel %vm66, 1.0, 0.0
  %v83 = vsel %vm67, 1.0, 0.0
  %v84 = vsel %vm68, 1.0, 0.0
  %v85 = vsel %vm69, 1.0, 0.0
  %v86 = vsel %vm70, 1.0, 0.0
  %v87 = vsel %vm71, 1.0, 0.0
  %v88 = vsel %vm72, 1.0, 0.0
  %v89 = vsel %vm73, 1.0, 0.0
  %v90 = vsel %vm74, 1.0, 0.0
  %v91 = vsel %vm75, 1.0, 0.0
  %v92 = vsel %vm76, 1.0, 0.0
  %v93 = vsel %vm77, 1.0, 0.0
  %v94 = vsel %vm78, 1.0, 0.0
  %v95 = vsel %vm79, 1.0, 0.0
  %v96 = vsel %vm80, 1.0, 0.0
  %v97 = vsel %vm81, 1.0, 0.0
  %v98 = vperm.slane %v47, 0
  %vm99 = vcmp.eq.s32.totalorder %v49, %v98
  %vm100 = vcmp.eq.s32.totalorder %v50, %v98
  %vm101 = vcmp.eq.s32.totalorder %v51, %v98
  %vm102 = vcmp.eq.s32.totalorder %v52, %v98
  %vm103 = vcmp.eq.s32.totalorder %v53, %v98
  %vm104 = vcmp.eq.s32.totalorder %v54, %v98
  %vm105 = vcmp.eq.s32.totalorder %v55, %v98
  %vm106 = vcmp.eq.s32.totalorder %v56, %v98
  %vm107 = vcmp.eq.s32.totalorder %v57, %v98
  %vm108 = vcmp.eq.s32.totalorder %v58, %v98
  %vm109 = vcmp.eq.s32.totalorder %v59, %v98
  %vm110 = vcmp.eq.s32.totalorder %v60, %v98
  %vm111 = vcmp.eq.s32.totalorder %v61, %v98
  %vm112 = vcmp.eq.s32.totalorder %v62, %v98
  %vm113 = vcmp.eq.s32.totalorder %v63, %v98
  %vm114 = vcmp.eq.s32.totalorder %v64, %v98
  %v115 = vsel %vm99, 1.0, 0.0
  %v116 = vsel %vm100, 1.0, 0.0
  %v117 = vsel %vm101, 1.0, 0.0
  %v118 = vsel %vm102, 1.0, 0.0
  %v119 = vsel %vm103, 1.0, 0.0
  %v120 = vsel %vm104, 1.0, 0.0
  %v121 = vsel %vm105, 1.0, 0.0
  %v122 = vsel %vm106, 1.0, 0.0
  %v123 = vsel %vm107, 1.0, 0.0
  %v124 = vsel %vm108, 1.0, 0.0
  %v125 = vsel %vm109, 1.0, 0.0
  %v126 = vsel %vm110, 1.0, 0.0
  %v127 = vsel %vm111, 1.0, 0.0
  %v128 = vsel %vm112, 1.0, 0.0
  %v129 = vsel %vm113, 1.0, 0.0
  %v130 = vsel %vm114, 1.0, 0.0
  %v131 = vld [vmem:[%s2] sm:$0xff]
  %v132 = vld [vmem:[%s2 + $0x8] sm:$0xff]
  %v133 = vld [vmem:[%s2 + $0x10] sm:$0xff]
  %v134 = vld [vmem:[%s2 + $0x18] sm:$0xff]
  %v135 = vld [vmem:[%s2 + $0x20] sm:$0xff]
  %v136 = vld [vmem:[%s2 + $0x28] sm:$0xff]
  %v137 = vld [vmem:[%s2 + $0x30] sm:$0xff]
  %v138 = vld [vmem:[%s2 + $0x38] sm:$0xff]
  %139 = vmatpush.msra.mxu0 %v97
  %140 = vmatpush.msra.mxu0 %v96
  %141 = vmatpush.msra.mxu0 %v95
  %142 = vmatpush.msra.mxu0 %v94
  %143 = vmatpush.msra.mxu0 %v93
  %144 = vmatpush.msra.mxu0 %v92
  %145 = vmatpush.msra.mxu0 %v91
  %146 = vmatpush.msra.mxu0 %v90
  %147 = vmatpush.msra.mxu0 %v89
  %148 = vmatpush.msra.mxu0 %v88
  %149 = vmatpush.msra.mxu0 %v87
  %150 = vmatpush.msra.mxu0 %v86
  %151 = vmatpush.msra.mxu0 %v85
  %152 = vmatpush.msra.mxu0 %v84
  %153 = vmatpush.msra.mxu0 %v83
  %154 = vmatpush.msra.mxu0 %v82
  %155 = vmatmul.f32.gmra.mxu0 %v131
  %v156 = vpop.f32.mrf.mxu0
  %v157 = vadd.f32 0.0, %v156
  %158 = vmatmul.f32.gmra.mxu0 %v132
  %v159 = vpop.f32.mrf.mxu0
  %v160 = vadd.f32 0.0, %v159
  %161 = vmatmul.f32.gmra.mxu0 %v133
  %v162 = vpop.f32.mrf.mxu0
  %v163 = vadd.f32 0.0, %v162
  %164 = vmatmul.f32.gmra.mxu0 %v134
  %v165 = vpop.f32.mrf.mxu0
  %v166 = vadd.f32 0.0, %v165
  %167 = vmatmul.f32.gmra.mxu0 %v135
  %v168 = vpop.f32.mrf.mxu0
  %v169 = vadd.f32 0.0, %v168
  %170 = vmatmul.f32.gmra.mxu0 %v136
  %v171 = vpop.f32.mrf.mxu0
  %v172 = vadd.f32 0.0, %v171
  %173 = vmatmul.f32.gmra.mxu0 %v137
  %v174 = vpop.f32.mrf.mxu0
  %v175 = vadd.f32 0.0, %v174
  %176 = vmatmul.f32.gmra.mxu0 %v138
  %v177 = vpop.f32.mrf.mxu0
  %v178 = vadd.f32 0.0, %v177
  %179 = vdwg.mxu0
  %v180 = vld [vmem:[%s3] sm:$0xff]
  %v181 = vld [vmem:[%s3 + $0x8] sm:$0xff]
  %v182 = vld [vmem:[%s3 + $0x10] sm:$0xff]
  %v183 = vld [vmem:[%s3 + $0x18] sm:$0xff]
  %v184 = vld [vmem:[%s3 + $0x20] sm:$0xff]
  %v185 = vld [vmem:[%s3 + $0x28] sm:$0xff]
  %v186 = vld [vmem:[%s3 + $0x30] sm:$0xff]
  %v187 = vld [vmem:[%s3 + $0x38] sm:$0xff]
  %188 = vmatpush.msra.mxu0 %v130
  %189 = vmatpush.msra.mxu0 %v129
  %190 = vmatpush.msra.mxu0 %v128
  %191 = vmatpush.msra.mxu0 %v127
  %192 = vmatpush.msra.mxu0 %v126
  %193 = vmatpush.msra.mxu0 %v125
  %194 = vmatpush.msra.mxu0 %v124
  %195 = vmatpush.msra.mxu0 %v123
  %196 = vmatpush.msra.mxu0 %v122
  %197 = vmatpush.msra.mxu0 %v121
  %198 = vmatpush.msra.mxu0 %v120
  %199 = vmatpush.msra.mxu0 %v119
  %200 = vmatpush.msra.mxu0 %v118
  %201 = vmatpush.msra.mxu0 %v117
  %202 = vmatpush.msra.mxu0 %v116
  %203 = vmatpush.msra.mxu0 %v115
  %204 = vmatmul.f32.gmra.mxu0 %v180
  %v205 = vpop.f32.mrf.mxu0
  %v206 = vadd.f32 0.0, %v205
  %207 = vmatmul.f32.gmra.mxu0 %v181
  %v208 = vpop.f32.mrf.mxu0
  %v209 = vadd.f32 0.0, %v208
  %210 = vmatmul.f32.gmra.mxu0 %v182
  %v211 = vpop.f32.mrf.mxu0
  %v212 = vadd.f32 0.0, %v211
  %213 = vmatmul.f32.gmra.mxu0 %v183
  %v214 = vpop.f32.mrf.mxu0
  %v215 = vadd.f32 0.0, %v214
  %216 = vmatmul.f32.gmra.mxu0 %v184
  %v217 = vpop.f32.mrf.mxu0
  %v218 = vadd.f32 0.0, %v217
  %219 = vmatmul.f32.gmra.mxu0 %v185
  %v220 = vpop.f32.mrf.mxu0
  %v221 = vadd.f32 0.0, %v220
  %222 = vmatmul.f32.gmra.mxu0 %v186
  %v223 = vpop.f32.mrf.mxu0
  %v224 = vadd.f32 0.0, %v223
  %225 = vmatmul.f32.gmra.mxu0 %v187
  %v226 = vpop.f32.mrf.mxu0
  %v227 = vadd.f32 0.0, %v226
  %228 = vdwg.mxu0
  %v229 = vld [vmem:[%s4] sm:$0xff]
  %v230 = vld [vmem:[%s4 + $0x8] sm:$0xff]
  %v231 = vld [vmem:[%s4 + $0x10] sm:$0xff]
  %v232 = vld [vmem:[%s4 + $0x18] sm:$0xff]
  %v233 = vld [vmem:[%s4 + $0x20] sm:$0xff]
  %v234 = vld [vmem:[%s4 + $0x28] sm:$0xff]
  %v235 = vld [vmem:[%s4 + $0x30] sm:$0xff]
  %v236 = vld [vmem:[%s4 + $0x38] sm:$0xff]
  %v237 = vld [vmem:[%s5] sm:$0xff]
  %v238 = vld [vmem:[%s5 + $0x8] sm:$0xff]
  %v239 = vld [vmem:[%s5 + $0x10] sm:$0xff]
  %v240 = vld [vmem:[%s5 + $0x18] sm:$0xff]
  %v241 = vld [vmem:[%s5 + $0x20] sm:$0xff]
  %v242 = vld [vmem:[%s5 + $0x28] sm:$0xff]
  %v243 = vld [vmem:[%s5 + $0x30] sm:$0xff]
  %v244 = vld [vmem:[%s5 + $0x38] sm:$0xff]
  %vm245 = vcmask 261120
  %v247 = vsel %vm245, %v237, 0
  %v250 = vsel %vm245, %v238, 0
  %v253 = vsel %vm245, %v239, 0
  %v256 = vsel %vm245, %v240, 0
  %v259 = vsel %vm245, %v241, 0
  %v262 = vsel %vm245, %v242, 0
  %v265 = vsel %vm245, %v243, 0
  %v268 = vsel %vm245, %v244, 0
  %270 = vmatpush.msra.mxu0 0.0
  %271 = vmatpush.msra.mxu0 0.0
  %272 = vmatpush.msra.mxu0 0.0
  %273 = vmatpush.msra.mxu0 0.0
  %274 = vmatpush.msra.mxu0 0.0
  %275 = vmatpush.msra.mxu0 0.0
  %276 = vmatpush.msra.mxu0 0.0
  %277 = vmatpush.msra.mxu0 0.0
  %278 = vmatpush.msra.mxu0 0.0
  %279 = vmatpush.msra.mxu0 0.0
  %280 = vmatpush.msra.mxu0 0.0
  %281 = vmatpush.msra.mxu0 0.0
  %282 = vmatpush.msra.mxu0 %v227
  %283 = vmatpush.msra.mxu0 %v224
  %284 = vmatpush.msra.mxu0 %v221
  %285 = vmatpush.msra.mxu0 %v218
  %286 = vmatmul.f32.gmra.mxu0 %v247
  %v287 = vpop.f32.mrf.mxu0
  %v288 = vadd.f32 0.0, %v287
  %289 = vmatmul.f32.gmra.mxu0 %v250
  %v290 = vpop.f32.mrf.mxu0
  %v291 = vadd.f32 0.0, %v290
  %292 = vmatmul.f32.gmra.mxu0 %v253
  %v293 = vpop.f32.mrf.mxu0
  %v294 = vadd.f32 0.0, %v293
  %295 = vmatmul.f32.gmra.mxu0 %v256
  %v296 = vpop.f32.mrf.mxu0
  %v297 = vadd.f32 0.0, %v296
  %298 = vmatmul.f32.gmra.mxu0 %v259
  %v299 = vpop.f32.mrf.mxu0
  %v300 = vadd.f32 0.0, %v299
  %301 = vmatmul.f32.gmra.mxu0 %v262
  %v302 = vpop.f32.mrf.mxu0
  %v303 = vadd.f32 0.0, %v302
  %304 = vmatmul.f32.gmra.mxu0 %v265
  %v305 = vpop.f32.mrf.mxu0
  %v306 = vadd.f32 0.0, %v305
  %307 = vmatmul.f32.gmra.mxu0 %v268
  %v308 = vpop.f32.mrf.mxu0
  %v309 = vadd.f32 0.0, %v308
  %310 = vdwg.mxu0
  %v312 = vsel %vm245, %v229, 0
  %v315 = vsel %vm245, %v230, 0
  %v318 = vsel %vm245, %v231, 0
  %v321 = vsel %vm245, %v232, 0
  %v324 = vsel %vm245, %v233, 0
  %v327 = vsel %vm245, %v234, 0
  %v330 = vsel %vm245, %v235, 0
  %v333 = vsel %vm245, %v236, 0
  %335 = vmatpush.msra.mxu0 0.0
  %336 = vmatpush.msra.mxu0 0.0
  %337 = vmatpush.msra.mxu0 0.0
  %338 = vmatpush.msra.mxu0 0.0
  %339 = vmatpush.msra.mxu0 0.0
  %340 = vmatpush.msra.mxu0 0.0
  %341 = vmatpush.msra.mxu0 0.0
  %342 = vmatpush.msra.mxu0 0.0
  %343 = vmatpush.msra.mxu0 0.0
  %344 = vmatpush.msra.mxu0 0.0
  %345 = vmatpush.msra.mxu0 0.0
  %346 = vmatpush.msra.mxu0 0.0
  %347 = vmatpush.msra.mxu0 %v178
  %348 = vmatpush.msra.mxu0 %v175
  %349 = vmatpush.msra.mxu0 %v172
  %350 = vmatpush.msra.mxu0 %v169
  %351 = vmatmul.f32.gmra.mxu0 %v312
  %v352 = vpop.f32.mrf.mxu0
  %v353 = vadd.f32 %v288, %v352
  %354 = vmatmul.f32.gmra.mxu0 %v315
  %v355 = vpop.f32.mrf.mxu0
  %v356 = vadd.f32 %v291, %v355
  %357 = vmatmul.f32.gmra.mxu0 %v318
  %v358 = vpop.f32.mrf.mxu0
  %v359 = vadd.f32 %v294, %v358
  %360 = vmatmul.f32.gmra.mxu0 %v321
  %v361 = vpop.f32.mrf.mxu0
  %v362 = vadd.f32 %v297, %v361
  %363 = vmatmul.f32.gmra.mxu0 %v324
  %v364 = vpop.f32.mrf.mxu0
  %v365 = vadd.f32 %v300, %v364
  %366 = vmatmul.f32.gmra.mxu0 %v327
  %v367 = vpop.f32.mrf.mxu0
  %v368 = vadd.f32 %v303, %v367
  %369 = vmatmul.f32.gmra.mxu0 %v330
  %v370 = vpop.f32.mrf.mxu0
  %v371 = vadd.f32 %v306, %v370
  %372 = vmatmul.f32.gmra.mxu0 %v333
  %v373 = vpop.f32.mrf.mxu0
  %v374 = vadd.f32 %v309, %v373
  %375 = vdwg.mxu0
  %v376 = vld [vmem:[%s6] sm:$0xff]
  %v377 = vld [vmem:[%s6 + $0x8] sm:$0xff]
  %v378 = vld [vmem:[%s6 + $0x10] sm:$0xff]
  %v379 = vld [vmem:[%s6 + $0x18] sm:$0xff]
  %v380 = vld [vmem:[%s6 + $0x20] sm:$0xff]
  %v381 = vld [vmem:[%s6 + $0x28] sm:$0xff]
  %v382 = vld [vmem:[%s6 + $0x30] sm:$0xff]
  %v383 = vld [vmem:[%s6 + $0x38] sm:$0xff]
  %385 = vset.pattern.permute.xlu0 0
  %386 = vperm.xlu0 %385, %v376
  %v387 = vpop.permute.xlu0 %386
  %390 = vset.pattern.permute.xlu0 0
  %391 = vperm.xlu0 %390, %v377
  %v392 = vpop.permute.xlu0 %391
  %395 = vset.pattern.permute.xlu0 0
  %396 = vperm.xlu0 %395, %v378
  %v397 = vpop.permute.xlu0 %396
  %400 = vset.pattern.permute.xlu0 0
  %401 = vperm.xlu0 %400, %v379
  %v402 = vpop.permute.xlu0 %401
  %405 = vset.pattern.permute.xlu0 0
  %406 = vperm.xlu0 %405, %v380
  %v407 = vpop.permute.xlu0 %406
  %410 = vset.pattern.permute.xlu0 0
  %411 = vperm.xlu0 %410, %v381
  %v412 = vpop.permute.xlu0 %411
  %415 = vset.pattern.permute.xlu0 0
  %416 = vperm.xlu0 %415, %v382
  %v417 = vpop.permute.xlu0 %416
  %420 = vset.pattern.permute.xlu0 0
  %421 = vperm.xlu0 %420, %v383
  %v422 = vpop.permute.xlu0 %421
  %v424 = vadd.f32 %v353, %v387
  %v425 = vadd.f32 %v356, %v392
  %v426 = vadd.f32 %v359, %v397
  %v427 = vadd.f32 %v362, %v402
  %v428 = vadd.f32 %v365, %v407
  %v429 = vadd.f32 %v368, %v412
  %v430 = vadd.f32 %v371, %v417
  %v431 = vadd.f32 %v374, %v422
  %v432 = vmax.f32 %v424, 0.0
  %v433 = vmax.f32 %v425, 0.0
  %v434 = vmax.f32 %v426, 0.0
  %v435 = vmax.f32 %v427, 0.0
  %v436 = vmax.f32 %v428, 0.0
  %v437 = vmax.f32 %v429, 0.0
  %v438 = vmax.f32 %v430, 0.0
  %v439 = vmax.f32 %v431, 0.0
  %v440 = vld [vmem:[%s7] sm:$0xff]
  %v441 = vld [vmem:[%s7 + $0x8] sm:$0xff]
  %v442 = vld [vmem:[%s7 + $0x10] sm:$0xff]
  %v443 = vld [vmem:[%s7 + $0x18] sm:$0xff]
  %v444 = vld [vmem:[%s8] sm:$0xff]
  %v445 = vld [vmem:[%s8 + $0x8] sm:$0xff]
  %v446 = vld [vmem:[%s8 + $0x10] sm:$0xff]
  %v447 = vld [vmem:[%s8 + $0x18] sm:$0xff]
  %449 = vset.pattern.permute.xlu0 0
  %450 = vperm.xlu0 %449, %v444
  %v451 = vpop.permute.xlu0 %450
  %454 = vset.pattern.permute.xlu0 0
  %455 = vperm.xlu0 %454, %v445
  %v456 = vpop.permute.xlu0 %455
  %459 = vset.pattern.permute.xlu0 0
  %460 = vperm.xlu0 %459, %v446
  %v461 = vpop.permute.xlu0 %460
  %464 = vset.pattern.permute.xlu0 0
  %465 = vperm.xlu0 %464, %v447
  %v466 = vpop.permute.xlu0 %465
  %vm468 = vcmask 523264
  %v470 = vsel %vm468, %v440, 0
  %v473 = vsel %vm468, %v441, 0
  %v476 = vsel %vm468, %v442, 0
  %v479 = vsel %vm468, %v443, 0
  %481 = vmatpush.msra.mxu0 0.0
  %482 = vmatpush.msra.mxu0 0.0
  %483 = vmatpush.msra.mxu0 0.0
  %484 = vmatpush.msra.mxu0 0.0
  %485 = vmatpush.msra.mxu0 0.0
  %486 = vmatpush.msra.mxu0 0.0
  %487 = vmatpush.msra.mxu0 0.0
  %488 = vmatpush.msra.mxu0 0.0
  %489 = vmatpush.msra.mxu0 %v439
  %490 = vmatpush.msra.mxu0 %v438
  %491 = vmatpush.msra.mxu0 %v437
  %492 = vmatpush.msra.mxu0 %v436
  %493 = vmatpush.msra.mxu0 %v435
  %494 = vmatpush.msra.mxu0 %v434
  %495 = vmatpush.msra.mxu0 %v433
  %496 = vmatpush.msra.mxu0 %v432
  %497 = vmatmul.f32.gmra.mxu0 %v470
  %v498 = vpop.f32.mrf.mxu0
  %v499 = vadd.f32 %v451, %v498
  %500 = vmatmul.f32.gmra.mxu0 %v473
  %v501 = vpop.f32.mrf.mxu0
  %v502 = vadd.f32 %v456, %v501
  %503 = vmatmul.f32.gmra.mxu0 %v476
  %v504 = vpop.f32.mrf.mxu0
  %v505 = vadd.f32 %v461, %v504
  %506 = vmatmul.f32.gmra.mxu0 %v479
  %v507 = vpop.f32.mrf.mxu0
  %v508 = vadd.f32 %v466, %v507
  %509 = vdwg.mxu0
  %v510 = vmax.f32 %v499, 0.0
  %v511 = vmax.f32 %v502, 0.0
  %v512 = vmax.f32 %v505, 0.0
  %v513 = vmax.f32 %v508, 0.0
  %v514 = vld [vmem:[%s9] sm:$0xff]
  %v515 = vld [vmem:[%s9 + $0x8] sm:$0xff]
  %v516 = vld [vmem:[%s10] sm:$0xff]
  %v517 = vld [vmem:[%s10 + $0x8] sm:$0xff]
  %519 = vset.pattern.permute.xlu0 0
  %520 = vperm.xlu0 %519, %v516
  %v521 = vpop.permute.xlu0 %520
  %524 = vset.pattern.permute.xlu0 0
  %525 = vperm.xlu0 %524, %v517
  %v526 = vpop.permute.xlu0 %525
  %v529 = vsel %vm245, %v514, 0
  %v532 = vsel %vm245, %v515, 0
  %534 = vmatpush.msra.mxu0 0.0
  %535 = vmatpush.msra.mxu0 0.0
  %536 = vmatpush.msra.mxu0 0.0
  %537 = vmatpush.msra.mxu0 0.0
  %538 = vmatpush.msra.mxu0 0.0
  %539 = vmatpush.msra.mxu0 0.0
  %540 = vmatpush.msra.mxu0 0.0
  %541 = vmatpush.msra.mxu0 0.0
  %542 = vmatpush.msra.mxu0 0.0
  %543 = vmatpush.msra.mxu0 0.0
  %544 = vmatpush.msra.mxu0 0.0
  %545 = vmatpush.msra.mxu0 0.0
  %546 = vmatpush.msra.mxu0 %v513
  %547 = vmatpush.msra.mxu0 %v512
  %548 = vmatpush.msra.mxu0 %v511
  %549 = vmatpush.msra.mxu0 %v510
  %550 = vmatmul.f32.gmra.mxu0 %v529
  %v551 = vpop.f32.mrf.mxu0
  %v552 = vadd.f32 %v521, %v551
  %553 = vmatmul.f32.gmra.mxu0 %v532
  %v554 = vpop.f32.mrf.mxu0
  %v555 = vadd.f32 %v526, %v554
  %556 = vdwg.mxu0
  %v557 = vmax.f32 %v552, 0.0
  %v558 = vmax.f32 %v555, 0.0
  %v559 = vmul.f32 %v157, %v206
  %v560 = vmul.f32 %v160, %v209
  %v561 = vmul.f32 %v163, %v212
  %v562 = vmul.f32 %v166, %v215
  %v563 = vld [vmem:[%s11] sm:$0x1]
  %v564 = vld [vmem:[#allocation2] sm:$0x1]
  %566 = vset.pattern.permute.xlu0 0
  %567 = vperm.xlu0 %566, %v564
  %v568 = vpop.permute.xlu0 %567
  %v570 = vperm.slane %v568, 0
  %vm571 = vcmask 392192
  %v573 = vsel %vm571, %v563, 0
  %575 = vmatpush.msra.mxu0 0.0
  %576 = vmatpush.msra.mxu0 0.0
  %577 = vmatpush.msra.mxu0 0.0
  %578 = vmatpush.msra.mxu0 0.0
  %579 = vmatpush.msra.mxu0 0.0
  %580 = vmatpush.msra.mxu0 0.0
  %581 = vmatpush.msra.mxu0 0.0
  %582 = vmatpush.msra.mxu0 0.0
  %583 = vmatpush.msra.mxu0 0.0
  %584 = vmatpush.msra.mxu0 0.0
  %585 = vmatpush.msra.mxu0 %v558
  %586 = vmatpush.msra.mxu0 %v557
  %587 = vmatpush.msra.mxu0 %v562
  %588 = vmatpush.msra.mxu0 %v561
  %589 = vmatpush.msra.mxu0 %v560
  %590 = vmatpush.msra.mxu0 %v559
  %591 = vmatmul.f32.gmra.mxu0 %v573
  %v592 = vpop.f32.mrf.mxu0
  %v593 = vadd.f32 %v570, %v592
  %594 = vdwg.mxu0
  %595 = vst [vmem:[%s13] sm:$0x1] %v593
  // Predicated region
  $region54: #{hybrid_recsys_forward.1} parent=0 // pred_check
    _
  $region55: #{hybrid_recsys_forward.1} parent=0 // pred_check_branch
    %597 = sbr.rel (0) target = $region57
  $region56: #{hybrid_recsys_forward.1} parent=0 // pred_region
    _
  $region57: #{hybrid_recsys_forward.1} parent=0 // pred_fallthru
    _
  // Predicated region
  $region58: #{hybrid_recsys_forward.1} parent=0 // pred_check
    _
  $region59: #{hybrid_recsys_forward.1} parent=0 // pred_check_branch
    %599 = sbr.rel (0) target = $region61
  $region60: #{hybrid_recsys_forward.1} parent=0 // pred_region
    _
  $region61: #{hybrid_recsys_forward.1} parent=0 // pred_fallthru
    _

</llo_original>
